<compile_context>
chip_gen: v7x
topology: tpu7x:2x2x1
jax: 0.10.0
libtpu: 0.0.40
codegen_flags: <defaults>
</compile_context>

<pallas_src>
import jax
import jax.numpy as jnp
from jax.experimental import pallas as pl
from jax.experimental.pallas import tpu as pltpu

# Index of 'year' in ['split_1','split_2','split_3','split_4','year','minute','hour',
#                     'month','day','weekday'] + xcols
YEAR_COL = 4
_BN_EPS = 1e-5

# Per-step VMEM footprint ~= 192 * TILE_N bytes (2 input bufs x 16-padded rows + 2 out
# bufs).  65536 fits v5e's 16 MiB default scoped VMEM; v6e can go to ~131072 (raise
# vmem_limit_bytes); v7x (64 MiB physical) should stay <= ~131072.
_DEFAULT_TILE_N = 65536


def ns_forecast_kernel(params_ref, feat_ref, out_ref):
    """One lane tile of the forecast head.

    params_ref: (1+F,) f32 SMEM  -- [bias_folded, w'_0, ..., w'_{F-1}]
                                    (w'_YEAR already includes the folded trend scale)
    feat_ref:   (F, TILE_N) f32 VMEM -- feature-major tile, N on the lane axis
    out_ref:    (1, TILE_N) f32 VMEM
    """
    f = feat_ref.shape[0]
    # Unrolled weighted sum over feature rows: F VPU FMAs, rows indexed off the ref
    # (static slices of a VMEM ref are free; no full-tile value is materialized).
    acc = feat_ref[0:1, :] * params_ref[1]
    for row in range(1, f):
        acc = acc + feat_ref[row:row + 1, :] * params_ref[1 + row]
    # Single fused, unmasked lane-dense store: seasonality + trend head + all biases.
    out_ref[...] = acc + params_ref[0]


def _round_up(x, m):
    return -(-x // m) * m


def ns_forecast(features_fm, w_seasonality, w_trend, b_trend, gamma, beta,
                b_seasonality, *, tile_n=None):
    """features_fm: (F, N) f32, FEATURE-MAJOR (no wrapper transpose).

    w_seasonality: (F,) or (F, 1) surrogate seasonality weights.
    Returns (N, 1) f32, matching the PyTorch module's output shape.
    """
    f, n = features_fm.shape
    features_fm = features_fm.astype(jnp.float32)
    w_rows = jnp.asarray(w_seasonality, jnp.float32).reshape(f)

    # --- BatchNorm1d batch stats of 'year' on the UNPADDED column (wrapper-side) ---
    year = features_fm[YEAR_COL, :]
    mean = jnp.mean(year)
    var = jnp.mean((year - mean) ** 2)                 # biased variance (training mode)
    inv_std = jax.lax.rsqrt(var + jnp.float32(_BN_EPS))

    # --- fold BN affine + Linear(1,1) + all biases into per-row weights + one bias ---
    scale = jnp.float32(gamma) * inv_std * jnp.float32(w_trend)
    bias = (jnp.float32(beta) * jnp.float32(w_trend) + jnp.float32(b_trend)
            + jnp.float32(b_seasonality) - scale * mean)
    w_rows = w_rows.at[YEAR_COL].add(scale)            # 'year' row read/FMA'd once
    params = jnp.concatenate([bias.reshape(1), w_rows]).astype(jnp.float32)  # (1+F,)

    # --- lane padding: keep output stores unmasked for arbitrary N ---
    n_lane = _round_up(n, 128)
    tn = tile_n if tile_n is not None else _DEFAULT_TILE_N
    tn = min(tn, n_lane)
    assert tn % 128 == 0, "tile_n must be a multiple of 128"
    n_pad = _round_up(n, tn)
    if n_pad != n:
        features_fm = jnp.pad(features_fm, ((0, 0), (0, n_pad - n)))

    grid_spec = pltpu.PrefetchScalarGridSpec(
        num_scalar_prefetch=0,
        grid=(n_pad // tn,),
        in_specs=[
            pl.BlockSpec(memory_space=pltpu.MemorySpace.SMEM),   # params (1+F,)
            pl.BlockSpec((f, tn), lambda i: (0, i)),             # features (F, n_pad)
        ],
        out_specs=pl.BlockSpec((1, tn), lambda i: (0, i)),
    )

    out = pl.pallas_call(
        ns_forecast_kernel,
        out_shape=jax.ShapeDtypeStruct((1, n_pad), jnp.float32),
        grid_spec=grid_spec,
        compiler_params=pltpu.CompilerParams(
            dimension_semantics=("parallel",),        # 2 TCs on v7x; harmless elsewhere
        ),
        cost_estimate=pl.CostEstimate(
            flops=2 * f * n_pad,
            transcendentals=0,
            bytes_accessed=(f + 1) * n_pad * 4 + (1 + f) * 4,
        ),
    )(params, features_fm)

    return out[0, :n].reshape(n, 1)


def reference_forward(features_fm, w_seasonality, w_trend, b_trend, gamma, beta,
                      b_seasonality):
    """Pure-JAX reference of the same math (un-folded, like the PyTorch module)."""
    w_rows = jnp.asarray(w_seasonality, jnp.float32).reshape(-1)
    year = features_fm[YEAR_COL, :]
    mean = jnp.mean(year)
    var = jnp.mean((year - mean) ** 2)
    bn = (year - mean) * jax.lax.rsqrt(var + _BN_EPS) * gamma + beta
    trend_out = bn * w_trend + b_trend
    seas = w_rows @ features_fm + b_seasonality
    return (trend_out + seas).reshape(-1, 1)


if __name__ == "__main__":
    # Small shapes implied by the module: F = 10 calendar features (xcols = []),
    # N = 500 rows (padded to 512 lanes, 4 grid tiles of 128 to exercise the pipeline).
    N, F = 500, 10
    TILE_N = 128

    key = jax.random.PRNGKey(0)
    k_feat, k_year, k_ws, k_tw = jax.random.split(key, 4)

    # Feature-major (F, N) end-to-end -> no transpose anywhere on the hot path.
    features_fm = jax.random.normal(k_feat, (F, N), dtype=jnp.float32)
    # Make the 'year' row look like real years so the BN/trend path is representative.
    features_fm = features_fm.at[YEAR_COL, :].set(
        2000.0 + jnp.floor(jax.random.uniform(k_year, (N,), dtype=jnp.float32) * 25.0))

    # Deterministic parameter init (synthetic; shapes from __init__):
    #   trend = nn.Linear(1, 1) -> w_trend, b_trend ; bn -> gamma=1, beta=0
    #   seasonality surrogate   -> w_seasonality (F,), b_seasonality
    w_trend = jax.random.uniform(k_tw, (), minval=-1.0, maxval=1.0, dtype=jnp.float32)
    b_trend = jnp.float32(0.1)
    gamma = jnp.float32(1.0)
    beta = jnp.float32(0.0)
    b_seasonality = jnp.float32(0.05)
    w_seasonality = 0.05 * jax.random.normal(k_ws, (F,), dtype=jnp.float32)

    out = ns_forecast(features_fm, w_seasonality, w_trend, b_trend, gamma, beta,
                      b_seasonality, tile_n=TILE_N)
    out = jax.block_until_ready(out)

    ref = reference_forward(features_fm, w_seasonality, w_trend, b_trend, gamma, beta,
                            b_seasonality)
    assert out.shape == (N, 1)
    assert jnp.allclose(out, ref, atol=2e-3, rtol=1e-4), \
        float(jnp.max(jnp.abs(out - ref)))

    print("KERNEL_OK")
</pallas_src>

<mosaic_0001>
module attributes {stable_mosaic.version = 11 : i64} {
  func.func @ns_forecast_kernel(%arg0: i32, %arg1: memref<11xf32, #tpu.memory_space<smem>>, %arg2: memref<10x128xf32, #tpu.memory_space<vmem>>, %arg3: memref<1x128xf32, #tpu.memory_space<vmem>>) attributes {dimension_semantics = [#tpu.dimension_semantics<parallel>], iteration_bounds = array<i64: 4>, scalar_prefetch = 0 : i64, scratch_operands = 0 : i64, tpu.core_type = #tpu.core_type<tc>, window_params = [{transform_indices = @transform_0, window_bounds = array<i64: 11>}, {transform_indices = @transform_1, window_bounds = array<i64: 10, 128>}, {transform_indices = @transform_2, window_bounds = array<i64: 1, 128>}]} {
    %c0 = arith.constant 0 : index
    %c0_0 = arith.constant 0 : index
    %0 = vector.load %arg2[%c0, %c0_0] : memref<10x128xf32, #tpu.memory_space<vmem>>, vector<1x128xf32>
    %c1 = arith.constant 1 : index
    %1 = memref.load %arg1[%c1] : memref<11xf32, #tpu.memory_space<smem>>
    %2 = vector.broadcast %1 : f32 to vector<1x128xf32>
    %3 = arith.mulf %0, %2 : vector<1x128xf32>
    %c1_1 = arith.constant 1 : index
    %c0_2 = arith.constant 0 : index
    %4 = vector.load %arg2[%c1_1, %c0_2] : memref<10x128xf32, #tpu.memory_space<vmem>>, vector<1x128xf32>
    %c2 = arith.constant 2 : index
    %5 = memref.load %arg1[%c2] : memref<11xf32, #tpu.memory_space<smem>>
    %6 = vector.broadcast %5 : f32 to vector<1x128xf32>
    %7 = arith.mulf %4, %6 : vector<1x128xf32>
    %8 = arith.addf %3, %7 : vector<1x128xf32>
    %c2_3 = arith.constant 2 : index
    %c0_4 = arith.constant 0 : index
    %9 = vector.load %arg2[%c2_3, %c0_4] : memref<10x128xf32, #tpu.memory_space<vmem>>, vector<1x128xf32>
    %c3 = arith.constant 3 : index
    %10 = memref.load %arg1[%c3] : memref<11xf32, #tpu.memory_space<smem>>
    %11 = vector.broadcast %10 : f32 to vector<1x128xf32>
    %12 = arith.mulf %9, %11 : vector<1x128xf32>
    %13 = arith.addf %8, %12 : vector<1x128xf32>
    %c3_5 = arith.constant 3 : index
    %c0_6 = arith.constant 0 : index
    %14 = vector.load %arg2[%c3_5, %c0_6] : memref<10x128xf32, #tpu.memory_space<vmem>>, vector<1x128xf32>
    %c4 = arith.constant 4 : index
    %15 = memref.load %arg1[%c4] : memref<11xf32, #tpu.memory_space<smem>>
    %16 = vector.broadcast %15 : f32 to vector<1x128xf32>
    %17 = arith.mulf %14, %16 : vector<1x128xf32>
    %18 = arith.addf %13, %17 : vector<1x128xf32>
    %c4_7 = arith.constant 4 : index
    %c0_8 = arith.constant 0 : index
    %19 = vector.load %arg2[%c4_7, %c0_8] : memref<10x128xf32, #tpu.memory_space<vmem>>, vector<1x128xf32>
    %c5 = arith.constant 5 : index
    %20 = memref.load %arg1[%c5] : memref<11xf32, #tpu.memory_space<smem>>
    %21 = vector.broadcast %20 : f32 to vector<1x128xf32>
    %22 = arith.mulf %19, %21 : vector<1x128xf32>
    %23 = arith.addf %18, %22 : vector<1x128xf32>
    %c5_9 = arith.constant 5 : index
    %c0_10 = arith.constant 0 : index
    %24 = vector.load %arg2[%c5_9, %c0_10] : memref<10x128xf32, #tpu.memory_space<vmem>>, vector<1x128xf32>
    %c6 = arith.constant 6 : index
    %25 = memref.load %arg1[%c6] : memref<11xf32, #tpu.memory_space<smem>>
    %26 = vector.broadcast %25 : f32 to vector<1x128xf32>
    %27 = arith.mulf %24, %26 : vector<1x128xf32>
    %28 = arith.addf %23, %27 : vector<1x128xf32>
    %c6_11 = arith.constant 6 : index
    %c0_12 = arith.constant 0 : index
    %29 = vector.load %arg2[%c6_11, %c0_12] : memref<10x128xf32, #tpu.memory_space<vmem>>, vector<1x128xf32>
    %c7 = arith.constant 7 : index
    %30 = memref.load %arg1[%c7] : memref<11xf32, #tpu.memory_space<smem>>
    %31 = vector.broadcast %30 : f32 to vector<1x128xf32>
    %32 = arith.mulf %29, %31 : vector<1x128xf32>
    %33 = arith.addf %28, %32 : vector<1x128xf32>
    %c7_13 = arith.constant 7 : index
    %c0_14 = arith.constant 0 : index
    %34 = vector.load %arg2[%c7_13, %c0_14] : memref<10x128xf32, #tpu.memory_space<vmem>>, vector<1x128xf32>
    %c8 = arith.constant 8 : index
    %35 = memref.load %arg1[%c8] : memref<11xf32, #tpu.memory_space<smem>>
    %36 = vector.broadcast %35 : f32 to vector<1x128xf32>
    %37 = arith.mulf %34, %36 : vector<1x128xf32>
    %38 = arith.addf %33, %37 : vector<1x128xf32>
    %c8_15 = arith.constant 8 : index
    %c0_16 = arith.constant 0 : index
    %39 = vector.load %arg2[%c8_15, %c0_16] : memref<10x128xf32, #tpu.memory_space<vmem>>, vector<1x128xf32>
    %c9 = arith.constant 9 : index
    %40 = memref.load %arg1[%c9] : memref<11xf32, #tpu.memory_space<smem>>
    %41 = vector.broadcast %40 : f32 to vector<1x128xf32>
    %42 = arith.mulf %39, %41 : vector<1x128xf32>
    %43 = arith.addf %38, %42 : vector<1x128xf32>
    %c9_17 = arith.constant 9 : index
    %c0_18 = arith.constant 0 : index
    %44 = vector.load %arg2[%c9_17, %c0_18] : memref<10x128xf32, #tpu.memory_space<vmem>>, vector<1x128xf32>
    %c10 = arith.constant 10 : index
    %45 = memref.load %arg1[%c10] : memref<11xf32, #tpu.memory_space<smem>>
    %46 = vector.broadcast %45 : f32 to vector<1x128xf32>
    %47 = arith.mulf %44, %46 : vector<1x128xf32>
    %48 = arith.addf %43, %47 : vector<1x128xf32>
    %c0_19 = arith.constant 0 : index
    %49 = memref.load %arg1[%c0_19] : memref<11xf32, #tpu.memory_space<smem>>
    %50 = vector.broadcast %49 : f32 to vector<1x128xf32>
    %51 = arith.addf %48, %50 : vector<1x128xf32>
    %c0_20 = arith.constant 0 : index
    %c0_21 = arith.constant 0 : index
    %52 = vector.load %arg3[%c0_20, %c0_21] : memref<1x128xf32, #tpu.memory_space<vmem>>, vector<1x128xf32>
    tpu.vector_store %arg3[%c0_20, %c0_21], %51 {strides = array<i32>} : memref<1x128xf32, #tpu.memory_space<vmem>>, vector<1x128xf32>,
    return
  }
  func.func @transform_0(%arg0: i32) -> i32 {
    %c0_i32 = arith.constant 0 : i32
    %c0_i32_0 = arith.constant 0 : i32
    return %c0_i32 : i32
  }
  func.func @transform_1(%arg0: i32) -> (i32, i32) {
    %c0_i32 = arith.constant 0 : i32
    %c0_i32_0 = arith.constant 0 : i32
    return %c0_i32, %arg0 : i32, i32
  }
  func.func @transform_2(%arg0: i32) -> (i32, i32) {
    %c0_i32 = arith.constant 0 : i32
    %c0_i32_0 = arith.constant 0 : i32
    return %c0_i32, %arg0 : i32, i32
  }
}

</mosaic_0001>

<llo_original>
// kernel: tpu_custom_call.1
$region0: #{tpu_custom_call.1}
  #allocation0 [shape = 'u32[]', space=smem, size = 0x4, offset = 0x4, fixed_abs, tag = 'smem constant byte address 0x4 - core index']
  #allocation1 [shape = 'u32[144,128]{1,0:T(1,128)}', space=vmem, size = 0x12000, scoped, tag = 'internal scratch']
  %s0 = inlined_call_operand.hbm [shape: f32[11], index: 0, kind: input, shape index: {}]
  %s1 = inlined_call_operand.hbm [shape: f32[10,512], index: 1, kind: input, shape index: {}]
  %s2 = inlined_call_operand.hbm [shape: f32[1,512], index: 2, kind: output, shape index: {}]
  %s3 = sld [smem:[#allocation0]]
  $region49: #{tpu_custom_call.1} parent=0
    _
  %s5 = ssub.s32 1, %s3
  %s6 = scalar_select 0, %s5, %s3
  $region1: #{tpu_custom_call.1} parent=0
    #allocation2 [shape = 'u8[512]{0}', space=smem, size = 0x200, scoped, tag = 'input window, operand 0, single buffered']
    #allocation3 [shape = 's32[2]{0}', space=sflag, size = 0x8, scoped, tag = 'scoped memory for tpu_custom_call.1']
    #allocation4 [shape = 's32[2]{0}', space=sflag, size = 0x8, scoped, tag = 'scoped memory for tpu_custom_call.1']
    #allocation5 [shape = 's32[2]{0}', space=sflag, size = 0x8, scoped, tag = 'scoped memory for tpu_custom_call.1']
    #allocation6 [shape = 'u8[16384]{0}', space=vmem, size = 0x4000, scoped, tag = 'input window, operand 1']
    #allocation7 [shape = 'u8[1024]{0}', space=vmem, size = 0x400, scoped, tag = 'output window, operand 0']
    %7 = vsyncpa [#allocation5], 0
    %8 = vsyncpa [#allocation3], 0
    %s9 = scalar_lea.sflag [#allocation3], 1
    %10 = vsyncpa %s9, 0
    %11 = vsyncpa [#allocation4], 0
    %s12 = scalar_lea.sflag [#allocation4], 1
    %13 = vsyncpa %s12, 0
    loop: start=0, step=1, limit=6
    $region2: #{tpu_custom_call.1} parent=1 // loop_pre_header
      _
    $region3: #{tpu_custom_call.1} parent=1 // loop_header
      %s15 = sphi 0, %s19
      %p16 = scmp.ge.s32.totalorder %s15, 6
      %s23 = sphi 0, %s23
      %s25 = sphi 0, %s23
      %s26 = sphi 0, %s25
      %s40 = sphi 0, %s26
      %s46 = sphi 0, %s48
      %s49 = sphi 0, %s46
      %s50 = sphi 0, %s49
      %s66 = sphi 0, %s50
      %s72 = sphi 0, %s74
      %s75 = sphi 0, %s72
      %s76 = sphi 0, %s75
      %s92 = sphi 0, %s76
    $region4: #{tpu_custom_call.1} parent=1 // loop_header_branch
      %18 = sbr.rel (%p16) target = $region8
    $region5: #{tpu_custom_call.1} parent=1 // loop_body
      %s20 = ssub.s32 %s15, 1
      %s21 = ssub.s32 %s15, 2
      %s22 = sadd.s32 %s15, 1
      %s24 = sadd.s32 %s23, 1
      %p27 = scmp.eq.s32.totalorder %s15, 3
      %p28 = scmp.ne.s32.totalorder %s23, %s25
      %p29 = scmp.eq.s32.totalorder %s15, 0
      %p30 = por %p28, %p29
      %p31 = scmp.ne.s32.totalorder %s23, %s25
      %p32 = scmp.eq.s32.totalorder %s20, 3
      %p33 = por %p31, %p32
      %p34 = scmp.ne.s32.totalorder %s25, %s26
      %p35 = scmp.eq.s32.totalorder %s20, 0
      %p36 = por %p34, %p35
      %p37 = scmp.ne.s32.totalorder %s25, %s26
      %p38 = scmp.eq.s32.totalorder %s21, 3
      %p39 = por %p37, %p38
      %p41 = scmp.ne.s32.totalorder %s26, %s40
      %p42 = scmp.eq.s32.totalorder %s21, 0
      %p43 = por %p41, %p42
      %s44 = ssub.s32 %s15, %s22
      %p45 = scmp.eq.s32.totalorder %s44, 0
      %s47 = sadd.s32 %s46, 1
      %s48 = scalar_select %p45, %s46, %s47
      %p51 = pneg %p45
      %p52 = scmp.eq.s32.totalorder %s15, 3
      %p53 = por %p51, %p52
      %p54 = scmp.ne.s32.totalorder %s46, %s49
      %p55 = scmp.eq.s32.totalorder %s15, 0
      %p56 = por %p54, %p55
      %p57 = scmp.ne.s32.totalorder %s46, %s49
      %p58 = scmp.eq.s32.totalorder %s20, 3
      %p59 = por %p57, %p58
      %p60 = scmp.ne.s32.totalorder %s49, %s50
      %p61 = scmp.eq.s32.totalorder %s20, 0
      %p62 = por %p60, %p61
      %p63 = scmp.ne.s32.totalorder %s49, %s50
      %p64 = scmp.eq.s32.totalorder %s21, 3
      %p65 = por %p63, %p64
      %p67 = scmp.ne.s32.totalorder %s50, %s66
      %p68 = scmp.eq.s32.totalorder %s21, 0
      %p69 = por %p67, %p68
      %s70 = ssub.s32 %s15, %s22
      %p71 = scmp.eq.s32.totalorder %s70, 0
      %s73 = sadd.s32 %s72, 1
      %s74 = scalar_select %p71, %s72, %s73
      %p77 = pneg %p71
      %p78 = scmp.eq.s32.totalorder %s15, 3
      %p79 = por %p77, %p78
      %p80 = scmp.ne.s32.totalorder %s72, %s75
      %p81 = scmp.eq.s32.totalorder %s15, 0
      %p82 = por %p80, %p81
      %p83 = scmp.ne.s32.totalorder %s72, %s75
      %p84 = scmp.eq.s32.totalorder %s20, 3
      %p85 = por %p83, %p84
      %p86 = scmp.ne.s32.totalorder %s75, %s76
      %p87 = scmp.eq.s32.totalorder %s20, 0
      %p88 = por %p86, %p87
      %p89 = scmp.ne.s32.totalorder %s75, %s76
      %p90 = scmp.eq.s32.totalorder %s21, 3
      %p91 = por %p89, %p90
      %p93 = scmp.ne.s32.totalorder %s76, %s92
      %p94 = scmp.eq.s32.totalorder %s21, 0
      %p95 = por %p93, %p94
      %p96 = scmp.le.s32.totalorder 1, %s15
      %p97 = scmp.lt.s32.totalorder %s15, 5
      %p98 = pnand %p96, %p97
      %p99 = pneg %p98
      // Predicated region
      $region9: #{tpu_custom_call.1} parent=5 // pred_check
        _
      $region10: #{tpu_custom_call.1} parent=5 // pred_check_branch
        %101 = sbr.rel (%p98) target = $region12
      $region11: #{tpu_custom_call.1} parent=5 // pred_region
        %s102 = ssub.s32 %s15, 1
        // Predicated region
        $region13: #{tpu_custom_call.1} parent=11 // pred_check
          %p103 = pneg %p36
        $region14: #{tpu_custom_call.1} parent=11 // pred_check_branch
          %105 = sbr.rel (%p103) target = $region16
        $region15: #{tpu_custom_call.1} parent=11 // pred_region
          %s107 = ssub.s32 16, 16
          %108 = vsyncadd [#allocation5], %s107
          %111 = dma.hbm_to_smem %s0, 16, [#allocation2], [#allocation5]
        $region16: #{tpu_custom_call.1} parent=11 // pred_fallthru
          _
      $region12: #{tpu_custom_call.1} parent=5 // pred_fallthru
        _
      %p112 = scmp.lt.s32.totalorder %s15, 4
      // Predicated region
      $region17: #{tpu_custom_call.1} parent=5 // pred_check
        %p113 = pneg %p112
      $region18: #{tpu_custom_call.1} parent=5 // pred_check_branch
        %115 = sbr.rel (%p113) target = $region20
      $region19: #{tpu_custom_call.1} parent=5 // pred_region
        // Predicated region
        $region21: #{tpu_custom_call.1} parent=19 // pred_check
          %p116 = pneg %p56
        $region22: #{tpu_custom_call.1} parent=19 // pred_check_branch
          %118 = sbr.rel (%p116) target = $region24
        $region23: #{tpu_custom_call.1} parent=19 // pred_region
          %s119 = sand.u32 %s46, 1
          %s120 = scalar_lea.sflag [#allocation3], %s119
          %s121 = sand.u32 %s46, 1
          %s122 = smul.addr %s121, 16
          %s123 = scalar_lea.vmem [#allocation6], %s122
          %s125 = ssub.s32 256, 256
          %126 = vsyncadd %s120, %s125
          %s127 = smul.addr %s15, 128
          %s128 = scalar_lea.hbm %s1, %s127
          %s129 = sshll.u32 %s123, 4
          %s130 = int_to_ptr.vmem [resolvable:$true] %s129
          %135 = dma.hbm_to_vmem [thread:$0]  %s128, 256, %s130, %s120, 512, 128, 8
        $region24: #{tpu_custom_call.1} parent=19 // pred_fallthru
          _
      $region20: #{tpu_custom_call.1} parent=5 // pred_fallthru
        _
      %p136 = scmp.le.s32.totalorder 1, %s15
      %p137 = scmp.lt.s32.totalorder %s15, 5
      %p138 = pnand %p136, %p137
      %p139 = pneg %p138
      // Predicated region
      $region25: #{tpu_custom_call.1} parent=5 // pred_check
        _
      $region26: #{tpu_custom_call.1} parent=5 // pred_check_branch
        %141 = sbr.rel (%p138) target = $region28
      $region27: #{tpu_custom_call.1} parent=5 // pred_region
        %s142 = ssub.s32 %s15, 1
        // Predicated region
        $region29: #{tpu_custom_call.1} parent=27 // pred_check
          %p143 = pneg %p36
        $region30: #{tpu_custom_call.1} parent=27 // pred_check_branch
          %145 = sbr.rel (%p143) target = $region32
        $region31: #{tpu_custom_call.1} parent=27 // pred_region
          %146 = dma.done [#allocation5], 16
        $region32: #{tpu_custom_call.1} parent=27 // pred_fallthru
          _
        %s147 = sand.u32 %s49, 1
        %s148 = scalar_lea.sflag [#allocation3], %s147
        %s149 = sand.u32 %s49, 1
        %s150 = smul.addr %s149, 16
        %s151 = scalar_lea.vmem [#allocation6], %s150
        // Predicated region
        $region33: #{tpu_custom_call.1} parent=27 // pred_check
          %p152 = pneg %p62
        $region34: #{tpu_custom_call.1} parent=27 // pred_check_branch
          %154 = sbr.rel (%p152) target = $region36
        $region35: #{tpu_custom_call.1} parent=27 // pred_region
          %155 = dma.done %s148, 256
        $region36: #{tpu_custom_call.1} parent=27 // pred_fallthru
          _
        %156 = sfence
        %p157 = pneg %p36
        %p158 = pneg %p33
        %s159 = sand.u32 %s49, 1
        %s160 = scalar_lea.sflag [#allocation3], %s159
        %s161 = sand.u32 %s49, 1
        %s162 = smul.addr %s161, 16
        %s163 = scalar_lea.vmem [#allocation6], %s162
        %p164 = pneg %p62
        %p165 = pneg %p59
        %p166 = pneg %p88
        %p167 = pneg %p85
        %s168 = sand.u32 %s75, 1
        %s169 = scalar_lea.sflag [#allocation4], %s168
        %s170 = sand.u32 %s75, 1
        %s171 = scalar_lea.vmem [#allocation7], %s170
        %v172 = vld [vmem:[%s151] sm:$0x1]
        %s173 = sld [smem:[#allocation2 + $0x1]]
        %v174 = vstv %s173
        %v175 = vmul.f32 %v172, %v174
        %v176 = vld [vmem:[%s151 + $0x1] sm:$0x1]
        %s177 = sld [smem:[#allocation2 + $0x2]]
        %v178 = vstv %s177
        %v179 = vmul.f32 %v176, %v178
        %v180 = vadd.f32 %v175, %v179
        %v181 = vld [vmem:[%s151 + $0x2] sm:$0x1]
        %s182 = sld [smem:[#allocation2 + $0x3]]
        %v183 = vstv %s182
        %v184 = vmul.f32 %v181, %v183
        %v185 = vadd.f32 %v180, %v184
        %v186 = vld [vmem:[%s151 + $0x3] sm:$0x1]
        %s187 = sld [smem:[#allocation2 + $0x4]]
        %v188 = vstv %s187
        %v189 = vmul.f32 %v186, %v188
        %v190 = vadd.f32 %v185, %v189
        %v191 = vld [vmem:[%s151 + $0x4] sm:$0x1]
        %s192 = sld [smem:[#allocation2 + $0x5]]
        %v193 = vstv %s192
        %v194 = vmul.f32 %v191, %v193
        %v195 = vadd.f32 %v190, %v194
        %v196 = vld [vmem:[%s151 + $0x5] sm:$0x1]
        %s197 = sld [smem:[#allocation2 + $0x6]]
        %v198 = vstv %s197
        %v199 = vmul.f32 %v196, %v198
        %v200 = vadd.f32 %v195, %v199
        %v201 = vld [vmem:[%s151 + $0x6] sm:$0x1]
        %s202 = sld [smem:[#allocation2 + $0x7]]
        %v203 = vstv %s202
        %v204 = vmul.f32 %v201, %v203
        %v205 = vadd.f32 %v200, %v204
        %v206 = vld [vmem:[%s151 + $0x7] sm:$0x1]
        %s207 = sld [smem:[#allocation2 + $0x8]]
        %v208 = vstv %s207
        %v209 = vmul.f32 %v206, %v208
        %v210 = vadd.f32 %v205, %v209
        %v211 = vld [vmem:[%s151 + $0x8] sm:$0x1]
        %s212 = sld [smem:[#allocation2 + $0x9]]
        %v213 = vstv %s212
        %v214 = vmul.f32 %v211, %v213
        %v215 = vadd.f32 %v210, %v214
        %v216 = vld [vmem:[%s151 + $0x9] sm:$0x1]
        %s217 = sld [smem:[#allocation2 + $0xa]]
        %v218 = vstv %s217
        %v219 = vmul.f32 %v216, %v218
        %v220 = vadd.f32 %v215, %v219
        %s221 = sld [smem:[#allocation2]]
        %v222 = vstv %s221
        %v223 = vadd.f32 %v220, %v222
        %224 = vst [vmem:[%s171] sm:$0x1] %v223
        %s225 = sand.u32 %s75, 1
        %s226 = scalar_lea.sflag [#allocation4], %s225
        %s227 = sand.u32 %s75, 1
        %s228 = scalar_lea.vmem [#allocation7], %s227
        // Predicated region
        $region37: #{tpu_custom_call.1} parent=27 // pred_check
          %p229 = pneg %p85
        $region38: #{tpu_custom_call.1} parent=27 // pred_check_branch
          %231 = sbr.rel (%p229) target = $region40
        $region39: #{tpu_custom_call.1} parent=27 // pred_region
          %s233 = ssub.s32 16, 16
          %234 = vsyncadd %s226, %s233
          %s235 = smul.addr %s20, 16
          %s236 = scalar_lea.hbm %s2, %s235
          %s238 = sshll.u32 %s228, 4
          %s239 = int_to_ptr.vmem [resolvable:$true] %s238
          %241 = dma.vmem_to_hbm [thread:$0]  %s239, 16, %s236, %s226
        $region40: #{tpu_custom_call.1} parent=27 // pred_fallthru
          _
      $region28: #{tpu_custom_call.1} parent=5 // pred_fallthru
        _
      %p242 = scmp.le.s32.totalorder 2, %s15
      // Predicated region
      $region41: #{tpu_custom_call.1} parent=5 // pred_check
        %p243 = pneg %p242
      $region42: #{tpu_custom_call.1} parent=5 // pred_check_branch
        %245 = sbr.rel (%p243) target = $region44
      $region43: #{tpu_custom_call.1} parent=5 // pred_region
        %s246 = ssub.s32 %s15, 2
        // Predicated region
        $region45: #{tpu_custom_call.1} parent=43 // pred_check
          %p247 = pneg %p91
        $region46: #{tpu_custom_call.1} parent=43 // pred_check_branch
          %249 = sbr.rel (%p247) target = $region48
        $region47: #{tpu_custom_call.1} parent=43 // pred_region
          %s250 = sand.u32 %s76, 1
          %s251 = scalar_lea.sflag [#allocation4], %s250
          %s252 = sand.u32 %s76, 1
          %s253 = scalar_lea.vmem [#allocation7], %s252
          %254 = dma.done %s251, 16
        $region48: #{tpu_custom_call.1} parent=43 // pred_fallthru
          _
      $region44: #{tpu_custom_call.1} parent=5 // pred_fallthru
        _
    $region6: #{tpu_custom_call.1} parent=1 // loop_footer
      %s19 = sadd.s32 1, %s15
    $region7: #{tpu_custom_call.1} parent=1 // loop_footer_branch
      %14 = sbr.rel target = $region3
    $region8: #{tpu_custom_call.1} parent=1 // loop_exit
      _
    %255 = vsyncpa [#allocation3], 1
    %s256 = scalar_lea.sflag [#allocation3], 1
    %257 = vsyncpa %s256, 1
    %258 = vsyncpa [#allocation4], 1
    %s259 = scalar_lea.sflag [#allocation4], 1
    %260 = vsyncpa %s259, 1
    %261 = vsyncpa [#allocation5], 1
    %s262 = scalar_lea.sflag [#allocation5], 1
    %263 = vsyncpa %s262, 1

</llo_original>
